<compile_context>
chip_gen: v6e
topology: v6e:2x2x1
jax: 0.10.0
libtpu: 0.0.40
codegen_flags: <defaults>
</compile_context>

<pallas_src>
import functools
import math

import jax
import jax.numpy as jnp
from jax.experimental import pallas as pl
from jax.experimental.pallas import tpu as pltpu


_SQRT_2_OVER_PI = math.sqrt(2.0 / math.pi)


def _gelu_tanh(x):
    # TODO(synk): PyTorch nn.GELU() default is erf-based; this is the GPT-2
    # tanh approximation (per-element difference < ~1e-3).
    return 0.5 * x * (1.0 + jnp.tanh(_SQRT_2_OVER_PI * (x + 0.044715 * x * x * x)))


# --------------------------------------------------------------------------
# Small helpers
# --------------------------------------------------------------------------
def _round_up(x, m):
    return ((x + m - 1) // m) * m


def _cdiv(a, b):
    return -(-a // b)


def _vmem_capacity_bytes():
    """Physical VMEM of the current generation (v5e/v6e: 128 MiB, v7x: 64 MiB)."""
    try:
        cap = int(pltpu.get_tpu_info().vmem_capacity_bytes)
        if cap > 0:
            return cap
    except Exception:
        pass
    return 64 << 20  # conservative default: v7x per-TensorCore VMEM


def _pick_tile(dim, target, granules=(256, 128)):
    """Largest tile <= target dividing `dim`, preferring bigger granules.
    Full dim (always a legal block) is the final fallback (weight dims only)."""
    if dim <= target:
        return dim
    for g in granules:
        t = (target // g) * g
        while t >= g:
            if dim % t == 0:
                return t
            t -= g
    return dim


def _choose_m_tile(M, tm_target, num_n_blocks):
    """Pick the M tile (multiple of 16 for bf16 sublane packing) and padded M."""
    tm = min(tm_target, _round_up(M, 16))
    # v7x shards "parallel" grid axes across its 2 TensorCores; try to expose
    # at least 2 parallel blocks when that is cheap (keeps tm a multiple of 16).
    while _cdiv(M, tm) * num_n_blocks < 2 and tm % 32 == 0 and tm > 16:
        tm //= 2
    return tm, _round_up(M, tm)


def _linear_vmem_bytes(tm, tn, tk, out_bytes):
    return (2 * (tm * tk + tk * tn) * 2       # double-buffered bf16 x / w tiles
            + 2 * tm * tn * out_bytes         # double-buffered output tile
            + tm * tn * 4                     # f32 accumulator scratch
            + 2 * tn * 4)                     # bias tile


def _fused_vmem_bytes(tm, C, H, out_bytes):
    return (2 * tm * C * 2                    # x tiles (bf16, double-buffered)
            + 2 * C * H * 2                   # w1 (bf16; resident, dbl-buffer alloc)
            + 2 * H * C * 2                   # w2
            + 2 * (H + C) * 4                 # biases
            + 2 * tm * C * out_bytes          # output tiles
            + tm * H * 2                      # bf16 intermediate scratch
            + tm * H * 4                      # f32 fc1 result before cast
            + tm * C * 4)                     # f32 fc2 result before cast


# --------------------------------------------------------------------------
# Tiled linear kernel:  y = act(x @ W + b)    (fallback path)
# --------------------------------------------------------------------------
def _linear_kernel(x_ref, w_ref, b_ref, o_ref, acc_ref, *, apply_gelu):
    k = pl.program_id(2)

    @pl.when(k == 0)
    def _():
        acc_ref[...] = jnp.zeros_like(acc_ref)

    # bf16 x bf16 -> f32 accumulation on the MXU.
    acc_ref[...] += jnp.dot(x_ref[...], w_ref[...],
                            preferred_element_type=jnp.float32)

    @pl.when(k == pl.num_programs(2) - 1)
    def _():
        y = acc_ref[...] + b_ref[...].astype(jnp.float32)
        if apply_gelu:
            y = _gelu_tanh(y)
        o_ref[...] = y.astype(o_ref.dtype)


def pallas_linear(x2d, w, b, *, apply_gelu=False, out_dtype=None,
                  tm_target=512, tn_target=1024, tk_target=1024):
    """x2d: (M, K), w: (K, N), b: (N,) -> (M, N) = act(x2d @ w + b)."""
    M, K = x2d.shape
    K2, N = w.shape
    assert K == K2 and b.shape == (N,)
    out_dtype = x2d.dtype if out_dtype is None else out_dtype
    out_bytes = jnp.dtype(out_dtype).itemsize

    budget = int(_vmem_capacity_bytes() * 0.85)   # ~54 MiB v7x, ~109 MiB v5e/v6e

    tn = _pick_tile(N, tn_target, (256, 128))
    tm, Mp = _choose_m_tile(M, tm_target, N // tn)

    # Prefer the full K as a single reduction step when the tiles still fit.
    if _linear_vmem_bytes(tm, tn, K, out_bytes) <= budget:
        tk = K
    else:
        tk = _pick_tile(K, tk_target, (256, 128))

    grid = (Mp // tm, N // tn, K // tk)
    est = _linear_vmem_bytes(tm, tn, tk, out_bytes)
    vmem_limit = int(min(budget, max(2 * est, 32 << 20)))

    # Pad awkward M (B*T) with zero rows instead of using a huge M tile.
    if Mp != M:
        x2d = jnp.pad(x2d, ((0, Mp - M), (0, 0)))

    x_bf = x2d.astype(jnp.bfloat16)                 # activations: cheap per-call cast
    w_bf = w.astype(jnp.bfloat16)                   # no-op when params pre-cast
    b_f32 = b.astype(jnp.float32).reshape(1, N)

    kernel = functools.partial(_linear_kernel, apply_gelu=apply_gelu)
    out = pl.pallas_call(
        kernel,
        out_shape=jax.ShapeDtypeStruct((Mp, N), out_dtype),
        grid_spec=pltpu.PrefetchScalarGridSpec(
            num_scalar_prefetch=0,
            grid=grid,
            in_specs=[
                pl.BlockSpec((tm, tk), lambda i, j, k: (i, k)),
                pl.BlockSpec((tk, tn), lambda i, j, k: (k, j)),
                pl.BlockSpec((1, tn), lambda i, j, k: (0, j)),
            ],
            out_specs=pl.BlockSpec((tm, tn), lambda i, j, k: (i, j)),
            scratch_shapes=[pltpu.VMEM((tm, tn), jnp.float32)],
        ),
        compiler_params=pltpu.CompilerParams(
            dimension_semantics=("parallel", "parallel", "arbitrary"),
            vmem_limit_bytes=vmem_limit,
        ),
    )(x_bf, w_bf, b_f32)
    return out[:M] if Mp != M else out


# --------------------------------------------------------------------------
# Fused MLP kernel:  y = (GELU(x @ W1 + b1)) @ W2 + b2   (single pallas_call)
# --------------------------------------------------------------------------
def _fused_mlp_kernel(x_ref, w1_ref, b1_ref, w2_ref, b2_ref, o_ref, h_ref):
    # fc1 (+ bias) in f32, GELU, keep the intermediate resident in VMEM (bf16).
    h = jnp.dot(x_ref[...], w1_ref[...], preferred_element_type=jnp.float32)
    h = _gelu_tanh(h + b1_ref[...].astype(jnp.float32))
    h_ref[...] = h.astype(h_ref.dtype)
    # fc2 (+ bias) straight from the VMEM intermediate: no HBM round trip.
    y = jnp.dot(h_ref[...], w2_ref[...], preferred_element_type=jnp.float32)
    o_ref[...] = (y + b2_ref[...].astype(jnp.float32)).astype(o_ref.dtype)


def pallas_mlp_fused(x2d, w1, b1, w2, b2, *, out_dtype=None, tm_target=512):
    M, C = x2d.shape
    H = w1.shape[1]
    assert w1.shape == (C, H) and w2.shape == (H, C)
    assert b1.shape == (H,) and b2.shape == (C,)
    out_dtype = x2d.dtype if out_dtype is None else out_dtype
    out_bytes = jnp.dtype(out_dtype).itemsize

    budget = int(_vmem_capacity_bytes() * 0.85)
    tm, Mp = _choose_m_tile(M, tm_target, 1)
    est = _fused_vmem_bytes(tm, C, H, out_bytes)
    assert est <= budget, "fused MLP tiles do not fit VMEM; use the tiled path"
    vmem_limit = int(min(budget, max(int(1.5 * est), 32 << 20)))

    if Mp != M:
        x2d = jnp.pad(x2d, ((0, Mp - M), (0, 0)))

    x_bf = x2d.astype(jnp.bfloat16)
    w1_bf = w1.astype(jnp.bfloat16)
    w2_bf = w2.astype(jnp.bfloat16)
    b1_f32 = b1.astype(jnp.float32).reshape(1, H)
    b2_f32 = b2.astype(jnp.float32).reshape(1, C)

    out = pl.pallas_call(
        _fused_mlp_kernel,
        out_shape=jax.ShapeDtypeStruct((Mp, C), out_dtype),
        grid_spec=pltpu.PrefetchScalarGridSpec(
            num_scalar_prefetch=0,
            grid=(Mp // tm,),
            in_specs=[
                pl.BlockSpec((tm, C), lambda i: (i, 0)),
                pl.BlockSpec((C, H), lambda i: (0, 0)),   # resident across the grid
                pl.BlockSpec((1, H), lambda i: (0, 0)),
                pl.BlockSpec((H, C), lambda i: (0, 0)),   # resident across the grid
                pl.BlockSpec((1, C), lambda i: (0, 0)),
            ],
            out_specs=pl.BlockSpec((tm, C), lambda i: (i, 0)),
            scratch_shapes=[pltpu.VMEM((tm, H), jnp.bfloat16)],
        ),
        compiler_params=pltpu.CompilerParams(
            dimension_semantics=("parallel",),
            vmem_limit_bytes=vmem_limit,
        ),
    )(x_bf, w1_bf, b1_f32, w2_bf, b2_f32)
    return out[:M] if Mp != M else out


# --------------------------------------------------------------------------
# Module forward:  y = fc2(GELU(fc1(x)))
# --------------------------------------------------------------------------
def prepare_params(params):
    """One-time cast of the weights to bf16 (MXU feed dtype), outside the hot path."""
    return {
        "w_fc1": params["w_fc1"].astype(jnp.bfloat16),
        "b_fc1": params["b_fc1"].astype(jnp.float32),
        "w_fc2": params["w_fc2"].astype(jnp.bfloat16),
        "b_fc2": params["b_fc2"].astype(jnp.float32),
    }


def mlp_forward(x, params, *, fuse=None):
    """x: (B, T, C) -> (B, T, C).  Mirrors the PyTorch MLP module."""
    B, T, C = x.shape
    x2d = x.reshape(B * T, C)
    H = params["w_fc1"].shape[1]
    out_dtype = x.dtype

    if fuse is None:
        tm_probe, _ = _choose_m_tile(B * T, 512, 1)
        fuse = (_fused_vmem_bytes(tm_probe, C, H, jnp.dtype(out_dtype).itemsize)
                <= int(_vmem_capacity_bytes() * 0.85))

    if fuse:
        y = pallas_mlp_fused(x2d, params["w_fc1"], params["b_fc1"],
                             params["w_fc2"], params["b_fc2"],
                             out_dtype=out_dtype)
    else:
        # fc1 + fused GELU; keep the (B*T, 4C) intermediate in bf16.
        h = pallas_linear(x2d, params["w_fc1"], params["b_fc1"],
                          apply_gelu=True, out_dtype=jnp.bfloat16)
        y = pallas_linear(h, params["w_fc2"], params["b_fc2"],
                          apply_gelu=False, out_dtype=out_dtype)
    return y.reshape(B, T, C)


# --------------------------------------------------------------------------
# Pure-JAX reference (same bf16 matmul inputs / f32 accumulation)
# --------------------------------------------------------------------------
def reference(x, params):
    B, T, C = x.shape
    x2d = x.reshape(B * T, C)
    h = jnp.dot(x2d.astype(jnp.bfloat16), params["w_fc1"].astype(jnp.bfloat16),
                preferred_element_type=jnp.float32) + params["b_fc1"].astype(jnp.float32)
    h = _gelu_tanh(h).astype(jnp.bfloat16)
    y = jnp.dot(h, params["w_fc2"].astype(jnp.bfloat16),
                preferred_element_type=jnp.float32) + params["b_fc2"].astype(jnp.float32)
    return y.reshape(B, T, C).astype(x.dtype)


if __name__ == "__main__":
    # Small GPT-2-ish config: batch=2, seq=8, embed_dim=32 (hidden = 4*32 = 128).
    B, T, C = 2, 8, 32

    key = jax.random.PRNGKey(0)
    kx, k1, k2, k3, k4 = jax.random.split(key, 5)

    x = jax.random.normal(kx, (B, T, C), dtype=jnp.float32)
    params = {
        "w_fc1": jax.random.normal(k1, (C, 4 * C), dtype=jnp.float32) * 0.02,
        "b_fc1": jax.random.normal(k2, (4 * C,), dtype=jnp.float32) * 0.02,
        "w_fc2": jax.random.normal(k3, (4 * C, C), dtype=jnp.float32) * 0.02,
        "b_fc2": jax.random.normal(k4, (C,), dtype=jnp.float32) * 0.02,
    }
    params_bf16 = prepare_params(params)   # one-time bf16 weight cast

    ref = jax.block_until_ready(reference(x, params))

    # Fused path (single pallas_call, intermediate resident in VMEM).
    out_fused = jax.block_until_ready(mlp_forward(x, params_bf16, fuse=True))
    # Tiled two-matmul fallback path (used when weights would not fit VMEM).
    out_tiled = jax.block_until_ready(mlp_forward(x, params_bf16, fuse=False))

    assert out_fused.shape == (B, T, C) and out_tiled.shape == (B, T, C)
    assert jnp.allclose(out_fused, ref, atol=1e-2, rtol=1e-2), "fused path mismatch"
    assert jnp.allclose(out_tiled, ref, atol=1e-2, rtol=1e-2), "tiled path mismatch"

    print("KERNEL_OK")
</pallas_src>

<mosaic_0001>
module attributes {stable_mosaic.version = 11 : i64} {
  func.func @_fused_mlp_kernel(%arg0: i32, %arg1: memref<16x32xbf16, #tpu.memory_space<vmem>>, %arg2: memref<32x128xbf16, #tpu.memory_space<vmem>>, %arg3: memref<1x128xf32, #tpu.memory_space<vmem>>, %arg4: memref<128x32xbf16, #tpu.memory_space<vmem>>, %arg5: memref<1x32xf32, #tpu.memory_space<vmem>>, %arg6: memref<16x32xf32, #tpu.memory_space<vmem>>, %arg7: memref<16x128xbf16, #tpu.memory_space<vmem>>) attributes {dimension_semantics = [#tpu.dimension_semantics<parallel>], iteration_bounds = array<i64: 1>, scalar_prefetch = 0 : i64, scratch_operands = 1 : i64, tpu.core_type = #tpu.core_type<tc>, window_params = [{transform_indices = @transform_0, window_bounds = array<i64: 16, 32>}, {pipeline_mode = #tpu.pipeline_mode<synchronous>, transform_indices = @transform_1, window_bounds = array<i64: 32, 128>}, {pipeline_mode = #tpu.pipeline_mode<synchronous>, transform_indices = @transform_2, window_bounds = array<i64: 1, 128>}, {pipeline_mode = #tpu.pipeline_mode<synchronous>, transform_indices = @transform_3, window_bounds = array<i64: 128, 32>}, {pipeline_mode = #tpu.pipeline_mode<synchronous>, transform_indices = @transform_4, window_bounds = array<i64: 1, 32>}, {transform_indices = @transform_5, window_bounds = array<i64: 16, 32>}]} {
    %c0 = arith.constant 0 : index
    %c0_0 = arith.constant 0 : index
    %0 = vector.load %arg1[%c0, %c0_0] : memref<16x32xbf16, #tpu.memory_space<vmem>>, vector<16x32xbf16>
    %c0_1 = arith.constant 0 : index
    %c0_2 = arith.constant 0 : index
    %1 = vector.load %arg2[%c0_1, %c0_2] : memref<32x128xbf16, #tpu.memory_space<vmem>>, vector<32x128xbf16>
    %cst = arith.constant dense<0.000000e+00> : vector<16x128xf32>
    %2 = tpu.matmul %0, %1, %cst {dimension_numbers = #tpu.dot_dimension_numbers<[1], [0], [0], [1], [0, 0, 1, 1], [], []>} : vector<16x32xbf16>, vector<32x128xbf16>, vector<16x128xf32> -> vector<16x128xf32>
    %c0_3 = arith.constant 0 : index
    %c0_4 = arith.constant 0 : index
    %3 = vector.load %arg3[%c0_3, %c0_4] : memref<1x128xf32, #tpu.memory_space<vmem>>, vector<1x128xf32>
    %4 = vector.broadcast %3 : vector<1x128xf32> to vector<16x128xf32>
    %5 = arith.addf %2, %4 : vector<16x128xf32>
    %cst_5 = arith.constant 5.000000e-01 : f32
    %6 = vector.broadcast %cst_5 : f32 to vector<16x128xf32>
    %7 = arith.mulf %6, %5 : vector<16x128xf32>
    %cst_6 = arith.constant 4.471500e-02 : f32
    %8 = vector.broadcast %cst_6 : f32 to vector<16x128xf32>
    %9 = arith.mulf %8, %5 : vector<16x128xf32>
    %10 = arith.mulf %9, %5 : vector<16x128xf32>
    %11 = arith.mulf %10, %5 : vector<16x128xf32>
    %12 = arith.addf %5, %11 : vector<16x128xf32>
    %cst_7 = arith.constant 0.797884583 : f32
    %13 = vector.broadcast %cst_7 : f32 to vector<16x128xf32>
    %14 = arith.mulf %13, %12 : vector<16x128xf32>
    %15 = math.tanh %14 : vector<16x128xf32>
    %cst_8 = arith.constant 1.000000e+00 : f32
    %16 = vector.broadcast %cst_8 : f32 to vector<16x128xf32>
    %17 = arith.addf %16, %15 : vector<16x128xf32>
    %18 = arith.mulf %7, %17 : vector<16x128xf32>
    %19 = arith.truncf %18 : vector<16x128xf32> to vector<16x128xbf16>
    %c0_9 = arith.constant 0 : index
    %c0_10 = arith.constant 0 : index
    %20 = vector.load %arg7[%c0_9, %c0_10] : memref<16x128xbf16, #tpu.memory_space<vmem>>, vector<16x128xbf16>
    tpu.vector_store %arg7[%c0_9, %c0_10], %19 {strides = array<i32>} : memref<16x128xbf16, #tpu.memory_space<vmem>>, vector<16x128xbf16>,
    %c0_11 = arith.constant 0 : index
    %c0_12 = arith.constant 0 : index
    %21 = vector.load %arg7[%c0_11, %c0_12] : memref<16x128xbf16, #tpu.memory_space<vmem>>, vector<16x128xbf16>
    %c0_13 = arith.constant 0 : index
    %c0_14 = arith.constant 0 : index
    %22 = vector.load %arg4[%c0_13, %c0_14] : memref<128x32xbf16, #tpu.memory_space<vmem>>, vector<128x32xbf16>
    %cst_15 = arith.constant dense<0.000000e+00> : vector<16x32xf32>
    %23 = tpu.matmul %21, %22, %cst_15 {dimension_numbers = #tpu.dot_dimension_numbers<[1], [0], [0], [1], [0, 0, 1, 1], [], []>} : vector<16x128xbf16>, vector<128x32xbf16>, vector<16x32xf32> -> vector<16x32xf32>
    %c0_16 = arith.constant 0 : index
    %c0_17 = arith.constant 0 : index
    %24 = vector.load %arg5[%c0_16, %c0_17] : memref<1x32xf32, #tpu.memory_space<vmem>>, vector<1x32xf32>
    %25 = vector.broadcast %24 : vector<1x32xf32> to vector<16x32xf32>
    %26 = arith.addf %23, %25 : vector<16x32xf32>
    %c0_18 = arith.constant 0 : index
    %c0_19 = arith.constant 0 : index
    %27 = vector.load %arg6[%c0_18, %c0_19] : memref<16x32xf32, #tpu.memory_space<vmem>>, vector<16x32xf32>
    tpu.vector_store %arg6[%c0_18, %c0_19], %26 {strides = array<i32>} : memref<16x32xf32, #tpu.memory_space<vmem>>, vector<16x32xf32>,
    return
  }
  func.func @transform_0(%arg0: i32) -> (i32, i32) {
    %c0_i32 = arith.constant 0 : i32
    %c0_i32_0 = arith.constant 0 : i32
    return %arg0, %c0_i32 : i32, i32
  }
  func.func @transform_1(%arg0: i32) -> (i32, i32) {
    %c0_i32 = arith.constant 0 : i32
    %c0_i32_0 = arith.constant 0 : i32
    %c0_i32_1 = arith.constant 0 : i32
    return %c0_i32, %c0_i32_0 : i32, i32
  }
  func.func @transform_2(%arg0: i32) -> (i32, i32) {
    %c0_i32 = arith.constant 0 : i32
    %c0_i32_0 = arith.constant 0 : i32
    %c0_i32_1 = arith.constant 0 : i32
    return %c0_i32, %c0_i32_0 : i32, i32
  }
  func.func @transform_3(%arg0: i32) -> (i32, i32) {
    %c0_i32 = arith.constant 0 : i32
    %c0_i32_0 = arith.constant 0 : i32
    %c0_i32_1 = arith.constant 0 : i32
    return %c0_i32, %c0_i32_0 : i32, i32
  }
  func.func @transform_4(%arg0: i32) -> (i32, i32) {
    %c0_i32 = arith.constant 0 : i32
    %c0_i32_0 = arith.constant 0 : i32
    %c0_i32_1 = arith.constant 0 : i32
    return %c0_i32, %c0_i32_0 : i32, i32
  }
  func.func @transform_5(%arg0: i32) -> (i32, i32) {
    %c0_i32 = arith.constant 0 : i32
    %c0_i32_0 = arith.constant 0 : i32
    return %arg0, %c0_i32 : i32, i32
  }
}

</mosaic_0001>

<llo_original>
// kernel: tpu_custom_call.1
$region0: #{tpu_custom_call.1}
  #allocation0 [shape = 'u32[]', space=smem, size = 0x4, offset = 0x4, fixed_abs, tag = 'smem constant byte address 0x4 - core index']
  #allocation1 [shape = 'u32[144,128]{1,0:T(1,128)}', space=vmem, size = 0x12000, scoped, tag = 'internal scratch']
  #allocation2 [shape = 'bf16[16,128]{1,0:T(8,128)(2,1)}', space=vmem, size = 0x1000, scoped, tag = 'scratch operand']
  %s0 = inlined_call_operand.vmem [shape: bf16[16,32], index: 0, kind: input, shape index: {}]
  %s1 = inlined_call_operand.vmem [shape: bf16[32,128], index: 1, kind: input, shape index: {}]
  %s2 = inlined_call_operand.vmem [shape: f32[1,128], index: 2, kind: input, shape index: {}]
  %s3 = inlined_call_operand.vmem [shape: bf16[128,32], index: 3, kind: input, shape index: {}]
  %s4 = inlined_call_operand.vmem [shape: f32[1,32], index: 4, kind: input, shape index: {}]
  %s5 = inlined_call_operand.hbm [shape: f32[16,32], index: 5, kind: output, shape index: {}]
  %s6 = sld [smem:[#allocation0]]
  $region30: #{tpu_custom_call.1} parent=0
    _
  %s8 = ssub.s32 1, %s6
  %s9 = scalar_select 0, %s8, %s6
  $region1: #{tpu_custom_call.1} parent=0
    #allocation3 [shape = 'u8[8192]{0}', space=vmem, size = 0x2000, scoped, tag = 'output window, operand 0, single buffered']
    #allocation4 [shape = 's32[1]{0}', space=sflag, size = 0x4, scoped, tag = 'scoped memory for tpu_custom_call.1']
    %10 = vsyncpa [#allocation4], 0
    // Predicated region
    $region2: #{tpu_custom_call.1} parent=1 // pred_check
      _
    $region3: #{tpu_custom_call.1} parent=1 // pred_check_branch
      %12 = sbr.rel (0) target = $region5
    $region4: #{tpu_custom_call.1} parent=1 // pred_region
      _
    $region5: #{tpu_custom_call.1} parent=1 // pred_fallthru
      _
    // Predicated region
    $region6: #{tpu_custom_call.1} parent=1 // pred_check
      _
    $region7: #{tpu_custom_call.1} parent=1 // pred_check_branch
      %14 = sbr.rel (0) target = $region9
    $region8: #{tpu_custom_call.1} parent=1 // pred_region
      _
    $region9: #{tpu_custom_call.1} parent=1 // pred_fallthru
      _
    // Predicated region
    $region10: #{tpu_custom_call.1} parent=1 // pred_check
      _
    $region11: #{tpu_custom_call.1} parent=1 // pred_check_branch
      %16 = sbr.rel (0) target = $region13
    $region12: #{tpu_custom_call.1} parent=1 // pred_region
      _
    $region13: #{tpu_custom_call.1} parent=1 // pred_fallthru
      _
    // Predicated region
    $region14: #{tpu_custom_call.1} parent=1 // pred_check
      _
    $region15: #{tpu_custom_call.1} parent=1 // pred_check_branch
      %18 = sbr.rel (0) target = $region17
    $region16: #{tpu_custom_call.1} parent=1 // pred_region
      _
    $region17: #{tpu_custom_call.1} parent=1 // pred_fallthru
      _
    // Predicated region
    $region18: #{tpu_custom_call.1} parent=1 // pred_check
      _
    $region19: #{tpu_custom_call.1} parent=1 // pred_check_branch
      %20 = sbr.rel (0) target = $region21
    $region20: #{tpu_custom_call.1} parent=1 // pred_region
      _
    $region21: #{tpu_custom_call.1} parent=1 // pred_fallthru
      _
    %v22 = vld [vmem:[%s0] sm:$0xf]
    %v23 = vld [vmem:[%s0 + $0x4] sm:$0xf]
    %v24 = vld [vmem:[%s1] sm:$0xf]
    %v25 = vld [vmem:[%s1 + $0x4] sm:$0xf]
    %v26 = vld [vmem:[%s1 + $0x8] sm:$0xf]
    %v27 = vld [vmem:[%s1 + $0xc] sm:$0xf]
    %v28 = vld [vmem:[%s2] sm:$0x1]
    %v30 = vlaneseq
    %v31 = vshrl.u32 %v30, 7
    %v32 = vsub.s32 0, %v31
    %v33 = vrot.slane %v28, %v32
    %v37 = vunpack.c.l.b16 %v22
    %v38 = vunpack.c.l.b16 %v23
    %v39 = vpack.c.b16 %v38, %v37
    %v44 = vunpack.c.l.b16 %v24
    %v45 = vunpack.c.l.b16 %v25
    %v46 = vunpack.c.l.b16 %v26
    %v47 = vunpack.c.l.b16 %v27
    %v48 = vpack.c.b16 %v45, %v44
    %v49 = vpack.c.b16 %v47, %v46
    %vm52 = vcmask 261120
    %v54 = vsel %vm52, %v39, 0
    %56 = vmatprep.subr.bf16.mxu0 0
    %57 = vmatpush1.bf16.msra.mxu0 0
    %58 = vmatprep.subr.bf16.mxu0 0
    %59 = vmatpush1.bf16.msra.mxu0 0
    %60 = vmatprep.subr.bf16.mxu0 0
    %61 = vmatpush1.bf16.msra.mxu0 0
    %62 = vmatprep.subr.bf16.mxu0 0
    %63 = vmatpush1.bf16.msra.mxu0 0
    %64 = vmatprep.subr.bf16.mxu0 0
    %65 = vmatpush1.bf16.msra.mxu0 0
    %66 = vmatprep.subr.bf16.mxu0 0
    %67 = vmatpush1.bf16.msra.mxu0 0
    %68 = vmatprep.subr.bf16.mxu0 0
    %69 = vmatpush1.bf16.msra.mxu0 %v49
    %70 = vmatprep.subr.bf16.mxu0 0
    %71 = vmatpush1.bf16.msra.mxu0 %v48
    %72 = vmatprep.subr.bf16.mxu0 0
    %73 = vmatpush2.bf16.msra.mxu0 0
    %74 = vmatprep.subr.bf16.mxu0 0
    %75 = vmatpush2.bf16.msra.mxu0 0
    %76 = vmatprep.subr.bf16.mxu0 0
    %77 = vmatpush2.bf16.msra.mxu0 0
    %78 = vmatprep.subr.bf16.mxu0 0
    %79 = vmatpush2.bf16.msra.mxu0 0
    %80 = vmatprep.subr.bf16.mxu0 0
    %81 = vmatpush2.bf16.msra.mxu0 0
    %82 = vmatprep.subr.bf16.mxu0 0
    %83 = vmatpush2.bf16.msra.mxu0 0
    %84 = vmatprep.subr.bf16.mxu0 0
    %85 = vmatpush2.bf16.msra.mxu0 0
    %86 = vmatprep.subr.bf16.mxu0 0
    %87 = vmatpush2.bf16.msra.mxu0 0
    %88 = vmatprep.mubr.bf16.mxu0 0
    %89 = vmatmul.mubr.bf16.gmra.mxu0 %v54
    %v90 = vpop.f32.mrf.mxu0
    %v91 = vadd.f32 %v33, %v90
    %v92 = vpop.f32.mrf.mxu0
    %v93 = vpop.f32.mrf.mxu0
    %v94 = vadd.f32 %v33, %v93
    %v95 = vpop.f32.mrf.mxu0
    %96 = vdwg.mxu0
    %v97 = vmul.f32 %v91, 0.5
    %v98 = vmul.f32 %v94, 0.5
    %v99 = vmul.f32 %v91, 0.044715
    %v100 = vmul.f32 %v94, 0.044715
    %v101 = vmul.f32 %v99, %v91
    %v102 = vmul.f32 %v100, %v94
    %v103 = vmul.f32 %v101, %v91
    %v104 = vmul.f32 %v102, %v94
    %v105 = vadd.f32 %v91, %v103
    %v106 = vadd.f32 %v94, %v104
    %v107 = vmul.f32 %v105, 0.7978846
    %v108 = vmul.f32 %v106, 0.7978846
    %v109 = vtanh.pop %v107
    %v110 = vtanh.pop %v108
    %v111 = vadd.f32 %v109, 1.0
    %v112 = vadd.f32 %v110, 1.0
    %v113 = vmul.f32 %v97, %v111
    %v114 = vmul.f32 %v98, %v112
    %v115 = vpack.c.bf16 %v114, %v113
    %v117 = vunpack.c.l.b16 %v115
    %v118 = vunpack.c.h.b16 %v115
    %v119 = vpack.c.b16 %v117, %v117
    %v120 = vpack.c.b16 %v118, %v118
    %123 = vst [vmem:[#allocation2] sm:$0xf] %v119
    %124 = vst [vmem:[#allocation2 + $0x4] sm:$0xf] %v120
    %v125 = vld [vmem:[#allocation2] sm:$0xf]
    %v126 = vld [vmem:[#allocation2 + $0x4] sm:$0xf]
    %v127 = vld [vmem:[%s3] sm:$0xf]
    %v128 = vld [vmem:[%s3 + $0x4] sm:$0xf]
    %v129 = vld [vmem:[%s3 + $0x8] sm:$0xf]
    %v130 = vld [vmem:[%s3 + $0xc] sm:$0xf]
    %v131 = vld [vmem:[%s3 + $0x10] sm:$0xf]
    %v132 = vld [vmem:[%s3 + $0x14] sm:$0xf]
    %v133 = vld [vmem:[%s3 + $0x18] sm:$0xf]
    %v134 = vld [vmem:[%s3 + $0x1c] sm:$0xf]
    %v135 = vld [vmem:[%s3 + $0x20] sm:$0xf]
    %v136 = vld [vmem:[%s3 + $0x24] sm:$0xf]
    %v137 = vld [vmem:[%s3 + $0x28] sm:$0xf]
    %v138 = vld [vmem:[%s3 + $0x2c] sm:$0xf]
    %v139 = vld [vmem:[%s3 + $0x30] sm:$0xf]
    %v140 = vld [vmem:[%s3 + $0x34] sm:$0xf]
    %v141 = vld [vmem:[%s3 + $0x38] sm:$0xf]
    %v142 = vld [vmem:[%s3 + $0x3c] sm:$0xf]
    %v143 = vld [vmem:[%s4] sm:$0x1]
    %v145 = vlaneseq
    %v146 = vshrl.u32 %v145, 7
    %v147 = vsub.s32 0, %v146
    %v148 = vrot.slane %v143, %v147
    %v152 = vunpack.c.l.b16 %v125
    %v153 = vunpack.c.l.b16 %v126
    %v154 = vpack.c.b16 %v153, %v152
    %v172 = vunpack.c.l.b16 %v127
    %v173 = vunpack.c.l.b16 %v128
    %v174 = vunpack.c.l.b16 %v129
    %v175 = vunpack.c.l.b16 %v130
    %v176 = vunpack.c.l.b16 %v131
    %v177 = vunpack.c.l.b16 %v132
    %v178 = vunpack.c.l.b16 %v133
    %v179 = vunpack.c.l.b16 %v134
    %v180 = vunpack.c.l.b16 %v135
    %v181 = vunpack.c.l.b16 %v136
    %v182 = vunpack.c.l.b16 %v137
    %v183 = vunpack.c.l.b16 %v138
    %v184 = vunpack.c.l.b16 %v139
    %v185 = vunpack.c.l.b16 %v140
    %v186 = vunpack.c.l.b16 %v141
    %v187 = vunpack.c.l.b16 %v142
    %v188 = vpack.c.b16 %v173, %v172
    %v189 = vpack.c.b16 %v175, %v174
    %v190 = vpack.c.b16 %v177, %v176
    %v191 = vpack.c.b16 %v179, %v178
    %v192 = vpack.c.b16 %v181, %v180
    %v193 = vpack.c.b16 %v183, %v182
    %v194 = vpack.c.b16 %v185, %v184
    %v195 = vpack.c.b16 %v187, %v186
    %204 = vmatprep.subr.bf16.mxu0 0
    %205 = vmatpush1.bf16.msra.mxu0 %v195
    %206 = vmatprep.subr.bf16.mxu0 0
    %207 = vmatpush1.bf16.msra.mxu0 %v194
    %208 = vmatprep.subr.bf16.mxu0 0
    %209 = vmatpush1.bf16.msra.mxu0 %v193
    %210 = vmatprep.subr.bf16.mxu0 0
    %211 = vmatpush1.bf16.msra.mxu0 %v192
    %212 = vmatprep.subr.bf16.mxu0 0
    %213 = vmatpush1.bf16.msra.mxu0 %v191
    %214 = vmatprep.subr.bf16.mxu0 0
    %215 = vmatpush1.bf16.msra.mxu0 %v190
    %216 = vmatprep.subr.bf16.mxu0 0
    %217 = vmatpush1.bf16.msra.mxu0 %v189
    %218 = vmatprep.subr.bf16.mxu0 0
    %219 = vmatpush1.bf16.msra.mxu0 %v188
    %220 = vmatprep.subr.bf16.mxu0 0
    %221 = vmatpush2.bf16.msra.mxu0 0
    %222 = vmatprep.subr.bf16.mxu0 0
    %223 = vmatpush2.bf16.msra.mxu0 0
    %224 = vmatprep.subr.bf16.mxu0 0
    %225 = vmatpush2.bf16.msra.mxu0 0
    %226 = vmatprep.subr.bf16.mxu0 0
    %227 = vmatpush2.bf16.msra.mxu0 0
    %228 = vmatprep.subr.bf16.mxu0 0
    %229 = vmatpush2.bf16.msra.mxu0 0
    %230 = vmatprep.subr.bf16.mxu0 0
    %231 = vmatpush2.bf16.msra.mxu0 0
    %232 = vmatprep.subr.bf16.mxu0 0
    %233 = vmatpush2.bf16.msra.mxu0 0
    %234 = vmatprep.subr.bf16.mxu0 0
    %235 = vmatpush2.bf16.msra.mxu0 0
    %236 = vmatprep.mubr.bf16.mxu0 0
    %237 = vmatmul.mubr.bf16.gmra.mxu0 %v154
    %v238 = vpop.f32.mrf.mxu0
    %v239 = vadd.f32 %v148, %v238
    %v240 = vpop.f32.mrf.mxu0
    %v241 = vpop.f32.mrf.mxu0
    %v242 = vadd.f32 %v148, %v241
    %v243 = vpop.f32.mrf.mxu0
    %244 = vdwg.mxu0
    %245 = vst.msk [vmem:[#allocation3] sm:$0xff] %vm52, %v239
    %246 = vst.msk [vmem:[#allocation3 + $0x8] sm:$0xff] %vm52, %v242
    // Predicated region
    $region22: #{tpu_custom_call.1} parent=1 // pred_check
      _
    $region23: #{tpu_custom_call.1} parent=1 // pred_check_branch
      %248 = sbr.rel (0) target = $region25
    $region24: #{tpu_custom_call.1} parent=1 // pred_region
      %s250 = ssub.s32 256, 256
      %251 = vsyncadd [#allocation4], %s250
      %s252 = sshll.u32 [#allocation3], 4
      %s253 = int_to_ptr.vmem [resolvable:$true] %s252
      %258 = dma.vmem_to_hbm [thread:$0]  %s253, 256, %s5, [#allocation4], 128, 128, 8
    $region25: #{tpu_custom_call.1} parent=1 // pred_fallthru
      _
    // Predicated region
    $region26: #{tpu_custom_call.1} parent=1 // pred_check
      _
    $region27: #{tpu_custom_call.1} parent=1 // pred_check_branch
      %260 = sbr.rel (0) target = $region29
    $region28: #{tpu_custom_call.1} parent=1 // pred_region
      %261 = dma.done [#allocation4], 256
    $region29: #{tpu_custom_call.1} parent=1 // pred_fallthru
      _
    %262 = vsyncpa [#allocation4], 1

</llo_original>
